<compile_context>
chip_gen: v6e
topology: v6e:2x2x1
jax: 0.10.0
libtpu: 0.0.40
codegen_flags: <defaults>
</compile_context>

<pallas_src>
import functools

import numpy as np
import jax
import jax.numpy as jnp
from jax.experimental import pallas as pl
from jax.experimental.pallas import tpu as pltpu

_LANE = 128         # vreg lane width
_MIN_TILE_B = 128   # >= 128 rows per matmul; multiple of 8 (f32) and 16 (bf16)
_MAX_TILE_B = 512   # keeps per-tile VMEM at a few MiB on v5e/v6e/v7x


def _round_up(n: int, m: int) -> int:
    return ((n + m - 1) // m) * m


# ----------------------------------------------------------------------------
# Pallas kernel: fully fused multi-head MLP (all layers, all heads, one call)
# ----------------------------------------------------------------------------
def _fused_mlp_kernel(x_ref, *refs, relu_flags):
    """refs = (w0, b0, w1, b1, ..., w_{L-1}, b_{L-1}, out_ref).

    One batch tile; the activation h stays in VMEM/vregs across all fused
    layers.  Weights are bf16 (MXU operands), biases f32; the matmul
    accumulates in f32 and bias + ReLU are applied in f32.
    """
    n_layers = len(relu_flags)
    o_ref = refs[2 * n_layers]
    h = x_ref[...]                                     # bf16 (TILE_B, Din_pad)
    for l in range(n_layers):
        w = refs[2 * l][...]                           # bf16
        b = refs[2 * l + 1][...]                       # f32 (1, N_pad)
        acc = jnp.dot(h, w, preferred_element_type=jnp.float32) + b   # MXU + VPU
        if relu_flags[l]:
            acc = jnp.maximum(acc, 0.0)
        h = acc.astype(w.dtype) if l + 1 < n_layers else acc
    o_ref[...] = h.astype(o_ref.dtype)                 # lane-dense 128-wide store


def _vmem_limit_bytes(tile_b, din_pad, weights, biases, out_pad):
    """Conservative per-call VMEM budget (double-buffered tiles + headroom)."""
    max_n = max(w.shape[1] for w in weights)
    total = 0
    total += 2 * tile_b * din_pad * 2                  # x tile (bf16), double-buffered
    total += 2 * tile_b * out_pad * 4                  # out tile (f32), double-buffered
    total += 2 * sum(int(w.size) * 2 for w in weights)  # fused weights (bf16)
    total += 2 * len(biases) * 8 * _LANE * 4           # biases padded to (8,128) f32
    total += 3 * tile_b * max_n * 4                    # live f32 intermediates (slack)
    total = int(total * 1.5) + (1 << 20)
    return max(4 << 20, min(total, 64 << 20))


def fused_mlp(x_pad: jax.Array, weights, biases, relu_flags, *, tile_b: int):
    """(B_pad, Din_pad) bf16 -> (B_pad, OUT_PAD) f32 in one pallas_call.

    1-D batch grid with constant index_maps for the tiny VMEM-resident fused
    weights; x / out tiles are double-buffered by the Pallas pipeline so DMA
    overlaps compute, and the batch axis is "parallel" (both v7x TCs).
    """
    b_pad, din_pad = x_pad.shape
    out_pad = weights[-1].shape[1]
    assert b_pad % tile_b == 0
    grid = (b_pad // tile_b,)

    vmem = pltpu.MemorySpace.VMEM
    in_specs = [pl.BlockSpec((tile_b, din_pad), lambda i: (i, 0), memory_space=vmem)]
    args = [x_pad]
    for w, b in zip(weights, biases):
        in_specs.append(pl.BlockSpec(w.shape, lambda i: (0, 0), memory_space=vmem))
        in_specs.append(pl.BlockSpec(b.shape, lambda i: (0, 0), memory_space=vmem))
        args.extend((w, b))
    out_specs = pl.BlockSpec((tile_b, out_pad), lambda i: (i, 0), memory_space=vmem)

    flops = 2 * b_pad * sum(w.shape[0] * w.shape[1] for w in weights)
    bytes_accessed = (int(x_pad.size) * x_pad.dtype.itemsize
                      + b_pad * out_pad * 4
                      + sum(int(w.size) * w.dtype.itemsize for w in weights)
                      + sum(int(b.size) * b.dtype.itemsize for b in biases))

    return pl.pallas_call(
        functools.partial(_fused_mlp_kernel, relu_flags=tuple(relu_flags)),
        grid=grid,
        in_specs=in_specs,
        out_specs=out_specs,
        out_shape=jax.ShapeDtypeStruct((b_pad, out_pad), jnp.float32),
        compiler_params=pltpu.CompilerParams(
            dimension_semantics=("parallel",),        # shard batch tiles across TCs
            vmem_limit_bytes=_vmem_limit_bytes(tile_b, din_pad, weights, biases,
                                               out_pad),
        ),
        cost_estimate=pl.CostEstimate(
            flops=flops, transcendentals=0, bytes_accessed=bytes_accessed),
    )(*args)


# ----------------------------------------------------------------------------
# Parameter construction (PyTorch-style layout, deterministic init)
# ----------------------------------------------------------------------------
def _init_linear(key, d_in, d_out, dtype=jnp.float32):
    """Kaiming-uniform-ish init, stored as (in, out) so y = x @ W + b."""
    kw, kb = jax.random.split(key)
    bound = 1.0 / jnp.sqrt(jnp.asarray(d_in, dtype))
    w = jax.random.uniform(kw, (d_in, d_out), dtype, minval=-bound, maxval=bound)
    b = jax.random.uniform(kb, (d_out,), dtype, minval=-bound, maxval=bound)
    return w, b


def _build_head_params(key, in_features, neurons_list, features):
    """Replicates SoftHeads.build_head: Linear+ReLU, [Linear+ReLU]*, Linear.

    Returns a list of (W (din,dout), b (dout,), relu_flag).  Dropout layers
    are identity at inference and carry no parameters.
    """
    layers = []
    keys = jax.random.split(key, len(neurons_list) + 1)
    layers.append(_init_linear(keys[0], in_features, neurons_list[0][0]) + (True,))
    for idx, (neurons, _dropout) in enumerate(neurons_list):
        if idx == len(neurons_list) - 1:
            layers.append(_init_linear(keys[idx + 1], neurons, features) + (False,))
        else:
            layers.append(
                _init_linear(keys[idx + 1], neurons, neurons_list[idx + 1][0]) + (True,)
            )
    return layers


def _fuse_heads(head_params, names, in_features, compute_dtype):
    """Fuse equal-depth heads into lane-dense (128-padded) block matrices.

    layer 0 : horizontal concat  (Din_pad, sum_h n0_h -> pad x128)
    layer l : block-diagonal     (prev_pad, sum_h n_l -> pad x128)
    Weights are cast to `compute_dtype` (bf16 MXU operands); biases stay f32.
    Returns (weights, biases, relu_flags, head_slices, total_out, din_pad).
    """
    n_layers = len(head_params[names[0]])
    relu_flags = tuple(head_params[names[0]][l][2] for l in range(n_layers))
    for name in names:
        assert len(head_params[name]) == n_layers, name
        assert tuple(p[2] for p in head_params[name]) == relu_flags, name

    din_pad = _round_up(in_features, _LANE)          # lane-dense x loads
    fused_ws, fused_bs = [], []
    prev_offsets = None
    prev_pad = din_pad
    for l in range(n_layers):
        total_out = sum(head_params[name][l][0].shape[1] for name in names)
        out_pad = _round_up(total_out, _LANE)        # lane-dense (unmasked) stores
        W = np.zeros((prev_pad, out_pad), np.float32)
        b = np.zeros((1, out_pad), np.float32)
        col = 0
        new_offsets = []
        for hi, name in enumerate(names):
            w_h, b_h, _ = head_params[name][l]
            dout = w_h.shape[1]
            if l == 0:
                W[:in_features, col:col + dout] = np.asarray(w_h)
            else:
                roff, rwidth = prev_offsets[hi]
                W[roff:roff + rwidth, col:col + dout] = np.asarray(w_h)
            b[0, col:col + dout] = np.asarray(b_h)
            new_offsets.append((col, dout))
            col += dout
        fused_ws.append(jnp.asarray(W, compute_dtype))   # bf16 MXU operand
        fused_bs.append(jnp.asarray(b, jnp.float32))     # f32 bias add
        prev_offsets = new_offsets
        prev_pad = out_pad

    head_slices = tuple((name, prev_offsets[hi]) for hi, name in enumerate(names))
    total_out = sum(feat for _, (_, feat) in head_slices)
    return tuple(fused_ws), tuple(fused_bs), relu_flags, head_slices, total_out, din_pad


# ----------------------------------------------------------------------------
# SoftHeads module
# ----------------------------------------------------------------------------
class SoftHeadsPallas:
    _HEAD_FEATURES = {
        "body_rotation_type": 3,
        "body_rotation_number": 1,
        "board_rotation_type": 3,
        "board_rotation_number": 1,
        "flip_type": 3,
        "flip_number": 1,
        "landed": 2,
        "stance": 4,
    }

    def __init__(self, in_features, byrt, byrn, bdrt, bdrn, ft, fn, landed,
                 stance, *, key=None, compute_dtype=jnp.bfloat16):
        if key is None:
            key = jax.random.PRNGKey(0)
        head_cfgs = {
            "body_rotation_type": byrt,
            "body_rotation_number": byrn,
            "board_rotation_type": bdrt,
            "board_rotation_number": bdrn,
            "flip_type": ft,
            "flip_number": fn,
            "landed": landed,
            "stance": stance,
        }
        keys = jax.random.split(key, len(head_cfgs))
        self.in_features = in_features
        self.compute_dtype = compute_dtype

        # Per-head (unfused) params kept for the pure-JAX reference check.
        self.params = {}
        for k, (name, cfg) in zip(keys, head_cfgs.items()):
            self.params[name] = _build_head_params(
                k, in_features, cfg, self._HEAD_FEATURES[name])

        # --- single-launch guarantee -------------------------------------
        # Pad shallower heads with identity(+ReLU) layers inserted just
        # before their final Linear: ReLU(h @ I + 0) == h for an activation
        # that already passed a ReLU, so outputs are unchanged and ALL heads
        # share one depth -> exactly one fused pallas_call, always.
        max_depth = max(len(v) for v in self.params.values())
        padded = {}
        for name, layers in self.params.items():
            layers = list(layers)
            while len(layers) < max_depth:
                k_in = layers[-1][0].shape[0]        # final layer's input width
                layers.insert(len(layers) - 1,
                              (jnp.eye(k_in, dtype=jnp.float32),
                               jnp.zeros((k_in,), jnp.float32), True))
            padded[name] = layers

        names = tuple(self._HEAD_FEATURES.keys())
        ws, bs, relu_flags, slices, total_out, din_pad = _fuse_heads(
            padded, names, in_features, compute_dtype)
        self._fused = (ws, bs)

        def _forward(x, fused):
            f_ws, f_bs = fused
            B = x.shape[0]
            # >=128 rows per matmul (fills MXU rows), <=512 keeps per-tile
            # VMEM at a few MiB on every TPU generation; a multiple of 128 is
            # sublane-clean for both bf16 (16) and f32 (8) tiles.
            tile_b = min(_MAX_TILE_B, _round_up(max(B, _MIN_TILE_B), _MIN_TILE_B))
            b_pad = _round_up(B, tile_b)
            xp = jnp.pad(x, ((0, b_pad - B), (0, din_pad - x.shape[1])))
            xp = xp.astype(compute_dtype)
            slab = fused_mlp(xp, f_ws, f_bs, relu_flags, tile_b=tile_b)
            # One lane-trim slice of the padded slab, then tiny per-head views
            # of the small (B, total_out) array.
            trimmed = slab[:B, :total_out]
            out = {}
            for name, (off, feat) in slices:
                out[name] = jax.lax.slice_in_dim(trimmed, off, off + feat, axis=1)
            return out

        # One jitted composite: a single dispatch for the whole forward.
        self._jit_forward = jax.jit(_forward)

    def __call__(self, x):
        return self._jit_forward(x, self._fused)


# ----------------------------------------------------------------------------
# Reference (plain JAX, per-head) mirroring the bf16-operand / f32-accumulate
# numerics of the kernel, for a sanity check.
# ----------------------------------------------------------------------------
def _ref_forward(params, x, compute_dtype=jnp.bfloat16):
    out = {}
    for name, layers in params.items():
        h = x
        for w, b, relu in layers:
            h = jnp.dot(h.astype(compute_dtype), w.astype(compute_dtype),
                        preferred_element_type=jnp.float32) + b
            if relu:
                h = jnp.maximum(h, 0.0)
        out[name] = h
    return out


if __name__ == "__main__":
    in_features = 32
    batch = 8

    # per-head hidden-layer specs: list of (neurons, dropout_p)
    hidden2 = [(16, 0.1), (16, 0.2)]
    hidden3 = [(16, 0.1), (16, 0.2), (16, 0.3)]   # deeper head: exercises the
                                                  # identity-padding single-launch path

    root = jax.random.PRNGKey(0)
    model_key, x_key = jax.random.split(root)

    model = SoftHeadsPallas(
        in_features,
        byrt=hidden2, byrn=hidden2, bdrt=hidden2, bdrn=hidden2,
        ft=hidden2, fn=hidden2, landed=hidden2, stance=hidden3,
        key=model_key,
    )

    x = jax.random.normal(x_key, (batch, in_features), jnp.float32)

    out = model(x)
    out = jax.block_until_ready(out)

    ref = _ref_forward(model.params, x, model.compute_dtype)
    for name in out:
        assert out[name].shape == ref[name].shape, name
        err = float(jnp.max(jnp.abs(out[name] - ref[name])))
        assert jnp.allclose(out[name], ref[name], atol=5e-4, rtol=5e-4), (name, err)

    print("KERNEL_OK")
</pallas_src>

<mosaic_0001>
module attributes {stable_mosaic.version = 11 : i64} {
  func.func @_fused_mlp_kernel(%arg0: i32, %arg1: memref<128x128xbf16, #tpu.memory_space<vmem>>, %arg2: memref<128x128xbf16, #tpu.memory_space<vmem>>, %arg3: memref<1x128xf32, #tpu.memory_space<vmem>>, %arg4: memref<128x128xbf16, #tpu.memory_space<vmem>>, %arg5: memref<1x128xf32, #tpu.memory_space<vmem>>, %arg6: memref<128x128xbf16, #tpu.memory_space<vmem>>, %arg7: memref<1x128xf32, #tpu.memory_space<vmem>>, %arg8: memref<128x128xbf16, #tpu.memory_space<vmem>>, %arg9: memref<1x128xf32, #tpu.memory_space<vmem>>, %arg10: memref<128x128xf32, #tpu.memory_space<vmem>>) attributes {dimension_semantics = [#tpu.dimension_semantics<parallel>], iteration_bounds = array<i64: 1>, scalar_prefetch = 0 : i64, scratch_operands = 0 : i64, tpu.core_type = #tpu.core_type<tc>, window_params = [{transform_indices = @transform_0, window_bounds = array<i64: 128, 128>}, {pipeline_mode = #tpu.pipeline_mode<synchronous>, transform_indices = @transform_1, window_bounds = array<i64: 128, 128>}, {pipeline_mode = #tpu.pipeline_mode<synchronous>, transform_indices = @transform_2, window_bounds = array<i64: 1, 128>}, {pipeline_mode = #tpu.pipeline_mode<synchronous>, transform_indices = @transform_3, window_bounds = array<i64: 128, 128>}, {pipeline_mode = #tpu.pipeline_mode<synchronous>, transform_indices = @transform_4, window_bounds = array<i64: 1, 128>}, {pipeline_mode = #tpu.pipeline_mode<synchronous>, transform_indices = @transform_5, window_bounds = array<i64: 128, 128>}, {pipeline_mode = #tpu.pipeline_mode<synchronous>, transform_indices = @transform_6, window_bounds = array<i64: 1, 128>}, {pipeline_mode = #tpu.pipeline_mode<synchronous>, transform_indices = @transform_7, window_bounds = array<i64: 128, 128>}, {pipeline_mode = #tpu.pipeline_mode<synchronous>, transform_indices = @transform_8, window_bounds = array<i64: 1, 128>}, {transform_indices = @transform_9, window_bounds = array<i64: 128, 128>}]} {
    %c0 = arith.constant 0 : index
    %c0_0 = arith.constant 0 : index
    %0 = vector.load %arg1[%c0, %c0_0] : memref<128x128xbf16, #tpu.memory_space<vmem>>, vector<128x128xbf16>
    %c0_1 = arith.constant 0 : index
    %c0_2 = arith.constant 0 : index
    %1 = vector.load %arg2[%c0_1, %c0_2] : memref<128x128xbf16, #tpu.memory_space<vmem>>, vector<128x128xbf16>
    %c0_3 = arith.constant 0 : index
    %c0_4 = arith.constant 0 : index
    %2 = vector.load %arg3[%c0_3, %c0_4] : memref<1x128xf32, #tpu.memory_space<vmem>>, vector<1x128xf32>
    %cst = arith.constant dense<0.000000e+00> : vector<128x128xf32>
    %3 = tpu.matmul %0, %1, %cst {dimension_numbers = #tpu.dot_dimension_numbers<[1], [0], [0], [1], [0, 0, 1, 1], [], []>} : vector<128x128xbf16>, vector<128x128xbf16>, vector<128x128xf32> -> vector<128x128xf32>
    %4 = vector.broadcast %2 : vector<1x128xf32> to vector<128x128xf32>
    %5 = arith.addf %3, %4 : vector<128x128xf32>
    %cst_5 = arith.constant 0.000000e+00 : f32
    %6 = vector.broadcast %cst_5 : f32 to vector<128x128xf32>
    %7 = arith.maximumf %5, %6 : vector<128x128xf32>
    %8 = arith.truncf %7 : vector<128x128xf32> to vector<128x128xbf16>
    %c0_6 = arith.constant 0 : index
    %c0_7 = arith.constant 0 : index
    %9 = vector.load %arg4[%c0_6, %c0_7] : memref<128x128xbf16, #tpu.memory_space<vmem>>, vector<128x128xbf16>
    %c0_8 = arith.constant 0 : index
    %c0_9 = arith.constant 0 : index
    %10 = vector.load %arg5[%c0_8, %c0_9] : memref<1x128xf32, #tpu.memory_space<vmem>>, vector<1x128xf32>
    %cst_10 = arith.constant dense<0.000000e+00> : vector<128x128xf32>
    %11 = tpu.matmul %8, %9, %cst_10 {dimension_numbers = #tpu.dot_dimension_numbers<[1], [0], [0], [1], [0, 0, 1, 1], [], []>} : vector<128x128xbf16>, vector<128x128xbf16>, vector<128x128xf32> -> vector<128x128xf32>
    %12 = vector.broadcast %10 : vector<1x128xf32> to vector<128x128xf32>
    %13 = arith.addf %11, %12 : vector<128x128xf32>
    %cst_11 = arith.constant 0.000000e+00 : f32
    %14 = vector.broadcast %cst_11 : f32 to vector<128x128xf32>
    %15 = arith.maximumf %13, %14 : vector<128x128xf32>
    %16 = arith.truncf %15 : vector<128x128xf32> to vector<128x128xbf16>
    %c0_12 = arith.constant 0 : index
    %c0_13 = arith.constant 0 : index
    %17 = vector.load %arg6[%c0_12, %c0_13] : memref<128x128xbf16, #tpu.memory_space<vmem>>, vector<128x128xbf16>
    %c0_14 = arith.constant 0 : index
    %c0_15 = arith.constant 0 : index
    %18 = vector.load %arg7[%c0_14, %c0_15] : memref<1x128xf32, #tpu.memory_space<vmem>>, vector<1x128xf32>
    %cst_16 = arith.constant dense<0.000000e+00> : vector<128x128xf32>
    %19 = tpu.matmul %16, %17, %cst_16 {dimension_numbers = #tpu.dot_dimension_numbers<[1], [0], [0], [1], [0, 0, 1, 1], [], []>} : vector<128x128xbf16>, vector<128x128xbf16>, vector<128x128xf32> -> vector<128x128xf32>
    %20 = vector.broadcast %18 : vector<1x128xf32> to vector<128x128xf32>
    %21 = arith.addf %19, %20 : vector<128x128xf32>
    %cst_17 = arith.constant 0.000000e+00 : f32
    %22 = vector.broadcast %cst_17 : f32 to vector<128x128xf32>
    %23 = arith.maximumf %21, %22 : vector<128x128xf32>
    %24 = arith.truncf %23 : vector<128x128xf32> to vector<128x128xbf16>
    %c0_18 = arith.constant 0 : index
    %c0_19 = arith.constant 0 : index
    %25 = vector.load %arg8[%c0_18, %c0_19] : memref<128x128xbf16, #tpu.memory_space<vmem>>, vector<128x128xbf16>
    %c0_20 = arith.constant 0 : index
    %c0_21 = arith.constant 0 : index
    %26 = vector.load %arg9[%c0_20, %c0_21] : memref<1x128xf32, #tpu.memory_space<vmem>>, vector<1x128xf32>
    %cst_22 = arith.constant dense<0.000000e+00> : vector<128x128xf32>
    %27 = tpu.matmul %24, %25, %cst_22 {dimension_numbers = #tpu.dot_dimension_numbers<[1], [0], [0], [1], [0, 0, 1, 1], [], []>} : vector<128x128xbf16>, vector<128x128xbf16>, vector<128x128xf32> -> vector<128x128xf32>
    %28 = vector.broadcast %26 : vector<1x128xf32> to vector<128x128xf32>
    %29 = arith.addf %27, %28 : vector<128x128xf32>
    %c0_23 = arith.constant 0 : index
    %c0_24 = arith.constant 0 : index
    %30 = vector.load %arg10[%c0_23, %c0_24] : memref<128x128xf32, #tpu.memory_space<vmem>>, vector<128x128xf32>
    tpu.vector_store %arg10[%c0_23, %c0_24], %29 {strides = array<i32>} : memref<128x128xf32, #tpu.memory_space<vmem>>, vector<128x128xf32>,
    return
  }
  func.func @transform_0(%arg0: i32) -> (i32, i32) {
    %c0_i32 = arith.constant 0 : i32
    %c0_i32_0 = arith.constant 0 : i32
    return %arg0, %c0_i32 : i32, i32
  }
  func.func @transform_1(%arg0: i32) -> (i32, i32) {
    %c0_i32 = arith.constant 0 : i32
    %c0_i32_0 = arith.constant 0 : i32
    %c0_i32_1 = arith.constant 0 : i32
    return %c0_i32, %c0_i32_0 : i32, i32
  }
  func.func @transform_2(%arg0: i32) -> (i32, i32) {
    %c0_i32 = arith.constant 0 : i32
    %c0_i32_0 = arith.constant 0 : i32
    %c0_i32_1 = arith.constant 0 : i32
    return %c0_i32, %c0_i32_0 : i32, i32
  }
  func.func @transform_3(%arg0: i32) -> (i32, i32) {
    %c0_i32 = arith.constant 0 : i32
    %c0_i32_0 = arith.constant 0 : i32
    %c0_i32_1 = arith.constant 0 : i32
    return %c0_i32, %c0_i32_0 : i32, i32
  }
  func.func @transform_4(%arg0: i32) -> (i32, i32) {
    %c0_i32 = arith.constant 0 : i32
    %c0_i32_0 = arith.constant 0 : i32
    %c0_i32_1 = arith.constant 0 : i32
    return %c0_i32, %c0_i32_0 : i32, i32
  }
  func.func @transform_5(%arg0: i32) -> (i32, i32) {
    %c0_i32 = arith.constant 0 : i32
    %c0_i32_0 = arith.constant 0 : i32
    %c0_i32_1 = arith.constant 0 : i32
    return %c0_i32, %c0_i32_0 : i32, i32
  }
  func.func @transform_6(%arg0: i32) -> (i32, i32) {
    %c0_i32 = arith.constant 0 : i32
    %c0_i32_0 = arith.constant 0 : i32
    %c0_i32_1 = arith.constant 0 : i32
    return %c0_i32, %c0_i32_0 : i32, i32
  }
  func.func @transform_7(%arg0: i32) -> (i32, i32) {
    %c0_i32 = arith.constant 0 : i32
    %c0_i32_0 = arith.constant 0 : i32
    %c0_i32_1 = arith.constant 0 : i32
    return %c0_i32, %c0_i32_0 : i32, i32
  }
  func.func @transform_8(%arg0: i32) -> (i32, i32) {
    %c0_i32 = arith.constant 0 : i32
    %c0_i32_0 = arith.constant 0 : i32
    %c0_i32_1 = arith.constant 0 : i32
    return %c0_i32, %c0_i32_0 : i32, i32
  }
  func.func @transform_9(%arg0: i32) -> (i32, i32) {
    %c0_i32 = arith.constant 0 : i32
    %c0_i32_0 = arith.constant 0 : i32
    return %arg0, %c0_i32 : i32, i32
  }
}

</mosaic_0001>

<llo_original>
// kernel: _forward.1
$region0: #{_forward.1}
  #allocation0 [shape = 'u32[]', space=smem, size = 0x4, offset = 0x4, fixed_abs, tag = 'smem constant byte address 0x4 - core index']
  #allocation1 [shape = 'u32[144,128]{1,0:T(1,128)}', space=vmem, size = 0x12000, scoped, tag = 'internal scratch']
  %s0 = inlined_call_operand.vmem [shape: bf16[128,128], index: 0, kind: input, shape index: {}]
  %s1 = inlined_call_operand.vmem [shape: bf16[128,128], index: 1, kind: input, shape index: {}]
  %s2 = inlined_call_operand.vmem [shape: f32[1,128], index: 2, kind: input, shape index: {}]
  %s3 = inlined_call_operand.hbm [shape: bf16[128,128], index: 3, kind: input, shape index: {}]
  %s4 = inlined_call_operand.vmem [shape: f32[1,128], index: 4, kind: input, shape index: {}]
  %s5 = inlined_call_operand.hbm [shape: bf16[128,128], index: 5, kind: input, shape index: {}]
  %s6 = inlined_call_operand.vmem [shape: f32[1,128], index: 6, kind: input, shape index: {}]
  %s7 = inlined_call_operand.hbm [shape: bf16[128,128], index: 7, kind: input, shape index: {}]
  %s8 = inlined_call_operand.vmem [shape: f32[1,128], index: 8, kind: input, shape index: {}]
  %s9 = inlined_call_operand.vmem [shape: f32[128,128], index: 9, kind: output, shape index: {}]
  %s10 = sld [smem:[#allocation0]]
  $region58: #{_forward.1} parent=0
    _
  %s12 = ssub.s32 1, %s10
  %s13 = scalar_select 0, %s12, %s10
  $region1: #{_forward.1} parent=0
    #allocation2 [shape = 'u8[32768]{0}', space=vmem, size = 0x8000, scoped, tag = 'input window, operand 3, single buffered']
    #allocation3 [shape = 's32[1]{0}', space=sflag, size = 0x4, scoped, tag = 'scoped memory for _forward.1']
    #allocation4 [shape = 'u8[32768]{0}', space=vmem, size = 0x8000, scoped, tag = 'input window, operand 5, single buffered']
    #allocation5 [shape = 's32[1]{0}', space=sflag, size = 0x4, scoped, tag = 'scoped memory for _forward.1']
    #allocation6 [shape = 'u8[32768]{0}', space=vmem, size = 0x8000, scoped, tag = 'input window, operand 7, single buffered']
    %14 = vsyncpa [#allocation3], 0
    %15 = vsyncpa [#allocation5], 0
    // Predicated region
    $region2: #{_forward.1} parent=1 // pred_check
      _
    $region3: #{_forward.1} parent=1 // pred_check_branch
      %17 = sbr.rel (0) target = $region5
    $region4: #{_forward.1} parent=1 // pred_region
      _
    $region5: #{_forward.1} parent=1 // pred_fallthru
      _
    // Predicated region
    $region6: #{_forward.1} parent=1 // pred_check
      _
    $region7: #{_forward.1} parent=1 // pred_check_branch
      %19 = sbr.rel (0) target = $region9
    $region8: #{_forward.1} parent=1 // pred_region
      _
    $region9: #{_forward.1} parent=1 // pred_fallthru
      _
    // Predicated region
    $region10: #{_forward.1} parent=1 // pred_check
      _
    $region11: #{_forward.1} parent=1 // pred_check_branch
      %21 = sbr.rel (0) target = $region13
    $region12: #{_forward.1} parent=1 // pred_region
      _
    $region13: #{_forward.1} parent=1 // pred_fallthru
      _
    // Predicated region
    $region14: #{_forward.1} parent=1 // pred_check
      _
    $region15: #{_forward.1} parent=1 // pred_check_branch
      %23 = sbr.rel (0) target = $region17
    $region16: #{_forward.1} parent=1 // pred_region
      %s25 = ssub.s32 1024, 1024
      %26 = vsyncadd [#allocation3], %s25
      %s27 = sshll.u32 [#allocation2], 4
      %s28 = int_to_ptr.vmem [resolvable:$true] %s27
      %33 = dma.hbm_to_vmem [thread:$0]  %s3, 1024, %s28, [#allocation3], 64, 64, 4
    $region17: #{_forward.1} parent=1 // pred_fallthru
      _
    // Predicated region
    $region18: #{_forward.1} parent=1 // pred_check
      _
    $region19: #{_forward.1} parent=1 // pred_check_branch
      %35 = sbr.rel (0) target = $region21
    $region20: #{_forward.1} parent=1 // pred_region
      _
    $region21: #{_forward.1} parent=1 // pred_fallthru
      _
    // Predicated region
    $region22: #{_forward.1} parent=1 // pred_check
      _
    $region23: #{_forward.1} parent=1 // pred_check_branch
      %37 = sbr.rel (0) target = $region25
    $region24: #{_forward.1} parent=1 // pred_region
      %s39 = ssub.s32 1024, 1024
      %40 = vsyncadd [#allocation5], %s39
      %s41 = sshll.u32 [#allocation4], 4
      %s42 = int_to_ptr.vmem [resolvable:$true] %s41
      %47 = dma.hbm_to_vmem [thread:$0]  %s5, 1024, %s42, [#allocation5], 64, 64, 4
    $region25: #{_forward.1} parent=1 // pred_fallthru
      _
    // Predicated region
    $region26: #{_forward.1} parent=1 // pred_check
      _
    $region27: #{_forward.1} parent=1 // pred_check_branch
      %49 = sbr.rel (0) target = $region29
    $region28: #{_forward.1} parent=1 // pred_region
      _
    $region29: #{_forward.1} parent=1 // pred_fallthru
      _
    // Predicated region
    $region30: #{_forward.1} parent=1 // pred_check
      _
    $region31: #{_forward.1} parent=1 // pred_check_branch
      %51 = sbr.rel (0) target = $region33
    $region32: #{_forward.1} parent=1 // pred_region
      %s53 = ssub.s32 1024, 1024
      %54 = vsyncadd [#allocation5], %s53
      %s55 = sshll.u32 [#allocation6], 4
      %s56 = int_to_ptr.vmem [resolvable:$true] %s55
      %61 = dma.hbm_to_vmem [thread:$0]  %s7, 1024, %s56, [#allocation5], 64, 64, 4
    $region33: #{_forward.1} parent=1 // pred_fallthru
      _
    // Predicated region
    $region34: #{_forward.1} parent=1 // pred_check
      _
    $region35: #{_forward.1} parent=1 // pred_check_branch
      %63 = sbr.rel (0) target = $region37
    $region36: #{_forward.1} parent=1 // pred_region
      _
    $region37: #{_forward.1} parent=1 // pred_fallthru
      _
    // Predicated region
    $region38: #{_forward.1} parent=1 // pred_check
      _
    $region39: #{_forward.1} parent=1 // pred_check_branch
      %65 = sbr.rel (0) target = $region41
    $region40: #{_forward.1} parent=1 // pred_region
      %66 = dma.done [#allocation3], 1024
    $region41: #{_forward.1} parent=1 // pred_fallthru
      _
    // Predicated region
    $region42: #{_forward.1} parent=1 // pred_check
      _
    $region43: #{_forward.1} parent=1 // pred_check_branch
      %68 = sbr.rel (0) target = $region45
    $region44: #{_forward.1} parent=1 // pred_region
      %69 = dma.done [#allocation5], 1024
    $region45: #{_forward.1} parent=1 // pred_fallthru
      _
    // Predicated region
    $region46: #{_forward.1} parent=1 // pred_check
      _
    $region47: #{_forward.1} parent=1 // pred_check_branch
      %71 = sbr.rel (0) target = $region49
    $region48: #{_forward.1} parent=1 // pred_region
      %72 = dma.done [#allocation5], 1024
    $region49: #{_forward.1} parent=1 // pred_fallthru
      _
    %v74 = vld [vmem:[%s0] sm:$0xf]
    %v75 = vld [vmem:[%s0 + $0x4] sm:$0xf]
    %v76 = vld [vmem:[%s0 + $0x8] sm:$0xf]
    %v77 = vld [vmem:[%s0 + $0xc] sm:$0xf]
    %v78 = vld [vmem:[%s0 + $0x10] sm:$0xf]
    %v79 = vld [vmem:[%s0 + $0x14] sm:$0xf]
    %v80 = vld [vmem:[%s0 + $0x18] sm:$0xf]
    %v81 = vld [vmem:[%s0 + $0x1c] sm:$0xf]
    %v82 = vld [vmem:[%s0 + $0x20] sm:$0xf]
    %v83 = vld [vmem:[%s0 + $0x24] sm:$0xf]
    %v84 = vld [vmem:[%s0 + $0x28] sm:$0xf]
    %v85 = vld [vmem:[%s0 + $0x2c] sm:$0xf]
    %v86 = vld [vmem:[%s0 + $0x30] sm:$0xf]
    %v87 = vld [vmem:[%s0 + $0x34] sm:$0xf]
    %v88 = vld [vmem:[%s0 + $0x38] sm:$0xf]
    %v89 = vld [vmem:[%s0 + $0x3c] sm:$0xf]
    %v90 = vld [vmem:[%s1] sm:$0xf]
    %v91 = vld [vmem:[%s1 + $0x4] sm:$0xf]
    %v92 = vld [vmem:[%s1 + $0x8] sm:$0xf]
    %v93 = vld [vmem:[%s1 + $0xc] sm:$0xf]
    %v94 = vld [vmem:[%s1 + $0x10] sm:$0xf]
    %v95 = vld [vmem:[%s1 + $0x14] sm:$0xf]
    %v96 = vld [vmem:[%s1 + $0x18] sm:$0xf]
    %v97 = vld [vmem:[%s1 + $0x1c] sm:$0xf]
    %v98 = vld [vmem:[%s1 + $0x20] sm:$0xf]
    %v99 = vld [vmem:[%s1 + $0x24] sm:$0xf]
    %v100 = vld [vmem:[%s1 + $0x28] sm:$0xf]
    %v101 = vld [vmem:[%s1 + $0x2c] sm:$0xf]
    %v102 = vld [vmem:[%s1 + $0x30] sm:$0xf]
    %v103 = vld [vmem:[%s1 + $0x34] sm:$0xf]
    %v104 = vld [vmem:[%s1 + $0x38] sm:$0xf]
    %v105 = vld [vmem:[%s1 + $0x3c] sm:$0xf]
    %v106 = vld [vmem:[%s2] sm:$0x1]
    %v108 = vlaneseq
    %v109 = vshrl.u32 %v108, 7
    %v110 = vsub.s32 0, %v109
    %v111 = vrot.slane %v106, %v110
    %v129 = vunpack.c.l.b16 %v74
    %v130 = vunpack.c.l.b16 %v75
    %v131 = vunpack.c.l.b16 %v76
    %v132 = vunpack.c.l.b16 %v77
    %v133 = vunpack.c.l.b16 %v78
    %v134 = vunpack.c.l.b16 %v79
    %v135 = vunpack.c.l.b16 %v80
    %v136 = vunpack.c.l.b16 %v81
    %v137 = vunpack.c.l.b16 %v82
    %v138 = vunpack.c.l.b16 %v83
    %v139 = vunpack.c.l.b16 %v84
    %v140 = vunpack.c.l.b16 %v85
    %v141 = vunpack.c.l.b16 %v86
    %v142 = vunpack.c.l.b16 %v87
    %v143 = vunpack.c.l.b16 %v88
    %v144 = vunpack.c.l.b16 %v89
    %v145 = vpack.c.b16 %v130, %v129
    %v146 = vpack.c.b16 %v132, %v131
    %v147 = vpack.c.b16 %v134, %v133
    %v148 = vpack.c.b16 %v136, %v135
    %v149 = vpack.c.b16 %v138, %v137
    %v150 = vpack.c.b16 %v140, %v139
    %v151 = vpack.c.b16 %v142, %v141
    %v152 = vpack.c.b16 %v144, %v143
    %v177 = vunpack.c.l.b16 %v90
    %v178 = vunpack.c.l.b16 %v91
    %v179 = vunpack.c.l.b16 %v92
    %v180 = vunpack.c.l.b16 %v93
    %v181 = vunpack.c.l.b16 %v94
    %v182 = vunpack.c.l.b16 %v95
    %v183 = vunpack.c.l.b16 %v96
    %v184 = vunpack.c.l.b16 %v97
    %v185 = vunpack.c.l.b16 %v98
    %v186 = vunpack.c.l.b16 %v99
    %v187 = vunpack.c.l.b16 %v100
    %v188 = vunpack.c.l.b16 %v101
    %v189 = vunpack.c.l.b16 %v102
    %v190 = vunpack.c.l.b16 %v103
    %v191 = vunpack.c.l.b16 %v104
    %v192 = vunpack.c.l.b16 %v105
    %v193 = vpack.c.b16 %v178, %v177
    %v194 = vpack.c.b16 %v180, %v179
    %v195 = vpack.c.b16 %v182, %v181
    %v196 = vpack.c.b16 %v184, %v183
    %v197 = vpack.c.b16 %v186, %v185
    %v198 = vpack.c.b16 %v188, %v187
    %v199 = vpack.c.b16 %v190, %v189
    %v200 = vpack.c.b16 %v192, %v191
    %209 = vmatprep.subr.bf16.mxu0 0
    %210 = vmatpush1.bf16.msra.mxu0 %v200
    %211 = vmatprep.subr.bf16.mxu0 0
    %212 = vmatpush1.bf16.msra.mxu0 %v199
    %213 = vmatprep.subr.bf16.mxu0 0
    %214 = vmatpush1.bf16.msra.mxu0 %v198
    %215 = vmatprep.subr.bf16.mxu0 0
    %216 = vmatpush1.bf16.msra.mxu0 %v197
    %217 = vmatprep.subr.bf16.mxu0 0
    %218 = vmatpush1.bf16.msra.mxu0 %v196
    %219 = vmatprep.subr.bf16.mxu0 0
    %220 = vmatpush1.bf16.msra.mxu0 %v195
    %221 = vmatprep.subr.bf16.mxu0 0
    %222 = vmatpush1.bf16.msra.mxu0 %v194
    %223 = vmatprep.subr.bf16.mxu0 0
    %224 = vmatpush1.bf16.msra.mxu0 %v193
    %225 = vmatprep.subr.bf16.mxu0 0
    %226 = vmatpush2.bf16.msra.mxu0 0
    %227 = vmatprep.subr.bf16.mxu0 0
    %228 = vmatpush2.bf16.msra.mxu0 0
    %229 = vmatprep.subr.bf16.mxu0 0
    %230 = vmatpush2.bf16.msra.mxu0 0
    %231 = vmatprep.subr.bf16.mxu0 0
    %232 = vmatpush2.bf16.msra.mxu0 0
    %233 = vmatprep.subr.bf16.mxu0 0
    %234 = vmatpush2.bf16.msra.mxu0 0
    %235 = vmatprep.subr.bf16.mxu0 0
    %236 = vmatpush2.bf16.msra.mxu0 0
    %237 = vmatprep.subr.bf16.mxu0 0
    %238 = vmatpush2.bf16.msra.mxu0 0
    %239 = vmatprep.subr.bf16.mxu0 0
    %240 = vmatpush2.bf16.msra.mxu0 0
    %241 = vmatprep.mubr.bf16.mxu0 0
    %242 = vmatmul.mubr.bf16.gmra.mxu0 %v145
    %v243 = vpop.f32.mrf.mxu0
    %v244 = vadd.f32 %v111, %v243
    %v245 = vpop.f32.mrf.mxu0
    %v246 = vpop.f32.mrf.mxu0
    %v247 = vadd.f32 %v111, %v246
    %v248 = vpop.f32.mrf.mxu0
    %249 = vmatprep.mubr.bf16.mxu0 0
    %250 = vmatmul.mubr.bf16.gmra.mxu0 %v146
    %v251 = vpop.f32.mrf.mxu0
    %v252 = vadd.f32 %v111, %v251
    %v253 = vpop.f32.mrf.mxu0
    %v254 = vpop.f32.mrf.mxu0
    %v255 = vadd.f32 %v111, %v254
    %v256 = vpop.f32.mrf.mxu0
    %257 = vmatprep.mubr.bf16.mxu0 0
    %258 = vmatmul.mubr.bf16.gmra.mxu0 %v147
    %v259 = vpop.f32.mrf.mxu0
    %v260 = vadd.f32 %v111, %v259
    %v261 = vpop.f32.mrf.mxu0
    %v262 = vpop.f32.mrf.mxu0
    %v263 = vadd.f32 %v111, %v262
    %v264 = vpop.f32.mrf.mxu0
    %265 = vmatprep.mubr.bf16.mxu0 0
    %266 = vmatmul.mubr.bf16.gmra.mxu0 %v148
    %v267 = vpop.f32.mrf.mxu0
    %v268 = vadd.f32 %v111, %v267
    %v269 = vpop.f32.mrf.mxu0
    %v270 = vpop.f32.mrf.mxu0
    %v271 = vadd.f32 %v111, %v270
    %v272 = vpop.f32.mrf.mxu0
    %273 = vmatprep.mubr.bf16.mxu0 0
    %274 = vmatmul.mubr.bf16.gmra.mxu0 %v149
    %v275 = vpop.f32.mrf.mxu0
    %v276 = vadd.f32 %v111, %v275
    %v277 = vpop.f32.mrf.mxu0
    %v278 = vpop.f32.mrf.mxu0
    %v279 = vadd.f32 %v111, %v278
    %v280 = vpop.f32.mrf.mxu0
    %281 = vmatprep.mubr.bf16.mxu0 0
    %282 = vmatmul.mubr.bf16.gmra.mxu0 %v150
    %v283 = vpop.f32.mrf.mxu0
    %v284 = vadd.f32 %v111, %v283
    %v285 = vpop.f32.mrf.mxu0
    %v286 = vpop.f32.mrf.mxu0
    %v287 = vadd.f32 %v111, %v286
    %v288 = vpop.f32.mrf.mxu0
    %289 = vmatprep.mubr.bf16.mxu0 0
    %290 = vmatmul.mubr.bf16.gmra.mxu0 %v151
    %v291 = vpop.f32.mrf.mxu0
    %v292 = vadd.f32 %v111, %v291
    %v293 = vpop.f32.mrf.mxu0
    %v294 = vpop.f32.mrf.mxu0
    %v295 = vadd.f32 %v111, %v294
    %v296 = vpop.f32.mrf.mxu0
    %297 = vmatprep.mubr.bf16.mxu0 0
    %298 = vmatmul.mubr.bf16.gmra.mxu0 %v152
    %v299 = vpop.f32.mrf.mxu0
    %v300 = vadd.f32 %v111, %v299
    %v301 = vpop.f32.mrf.mxu0
    %v302 = vpop.f32.mrf.mxu0
    %v303 = vadd.f32 %v111, %v302
    %v304 = vpop.f32.mrf.mxu0
    %305 = vdwg.mxu0
    %v306 = vmax.f32 %v244, 0.0
    %v307 = vmax.f32 %v247, 0.0
    %v308 = vmax.f32 %v252, 0.0
    %v309 = vmax.f32 %v255, 0.0
    %v310 = vmax.f32 %v260, 0.0
    %v311 = vmax.f32 %v263, 0.0
    %v312 = vmax.f32 %v268, 0.0
    %v313 = vmax.f32 %v271, 0.0
    %v314 = vmax.f32 %v276, 0.0
    %v315 = vmax.f32 %v279, 0.0
    %v316 = vmax.f32 %v284, 0.0
    %v317 = vmax.f32 %v287, 0.0
    %v318 = vmax.f32 %v292, 0.0
    %v319 = vmax.f32 %v295, 0.0
    %v320 = vmax.f32 %v300, 0.0
    %v321 = vmax.f32 %v303, 0.0
    %v322 = vpack.c.bf16 %v307, %v306
    %v323 = vpack.c.bf16 %v309, %v308
    %v324 = vpack.c.bf16 %v311, %v310
    %v325 = vpack.c.bf16 %v313, %v312
    %v326 = vpack.c.bf16 %v315, %v314
    %v327 = vpack.c.bf16 %v317, %v316
    %v328 = vpack.c.bf16 %v319, %v318
    %v329 = vpack.c.bf16 %v321, %v320
    %v330 = vld [vmem:[#allocation2] sm:$0xf]
    %v331 = vld [vmem:[#allocation2 + $0x4] sm:$0xf]
    %v332 = vld [vmem:[#allocation2 + $0x8] sm:$0xf]
    %v333 = vld [vmem:[#allocation2 + $0xc] sm:$0xf]
    %v334 = vld [vmem:[#allocation2 + $0x10] sm:$0xf]
    %v335 = vld [vmem:[#allocation2 + $0x14] sm:$0xf]
    %v336 = vld [vmem:[#allocation2 + $0x18] sm:$0xf]
    %v337 = vld [vmem:[#allocation2 + $0x1c] sm:$0xf]
    %v338 = vld [vmem:[#allocation2 + $0x20] sm:$0xf]
    %v339 = vld [vmem:[#allocation2 + $0x24] sm:$0xf]
    %v340 = vld [vmem:[#allocation2 + $0x28] sm:$0xf]
    %v341 = vld [vmem:[#allocation2 + $0x2c] sm:$0xf]
    %v342 = vld [vmem:[#allocation2 + $0x30] sm:$0xf]
    %v343 = vld [vmem:[#allocation2 + $0x34] sm:$0xf]
    %v344 = vld [vmem:[#allocation2 + $0x38] sm:$0xf]
    %v345 = vld [vmem:[#allocation2 + $0x3c] sm:$0xf]
    %v346 = vld [vmem:[%s4] sm:$0x1]
    %v348 = vlaneseq
    %v349 = vshrl.u32 %v348, 7
    %v350 = vsub.s32 0, %v349
    %v351 = vrot.slane %v346, %v350
    %v369 = vunpack.c.l.b16 %v330
    %v370 = vunpack.c.l.b16 %v331
    %v371 = vunpack.c.l.b16 %v332
    %v372 = vunpack.c.l.b16 %v333
    %v373 = vunpack.c.l.b16 %v334
    %v374 = vunpack.c.l.b16 %v335
    %v375 = vunpack.c.l.b16 %v336
    %v376 = vunpack.c.l.b16 %v337
    %v377 = vunpack.c.l.b16 %v338
    %v378 = vunpack.c.l.b16 %v339
    %v379 = vunpack.c.l.b16 %v340
    %v380 = vunpack.c.l.b16 %v341
    %v381 = vunpack.c.l.b16 %v342
    %v382 = vunpack.c.l.b16 %v343
    %v383 = vunpack.c.l.b16 %v344
    %v384 = vunpack.c.l.b16 %v345
    %v385 = vpack.c.b16 %v370, %v369
    %v386 = vpack.c.b16 %v372, %v371
    %v387 = vpack.c.b16 %v374, %v373
    %v388 = vpack.c.b16 %v376, %v375
    %v389 = vpack.c.b16 %v378, %v377
    %v390 = vpack.c.b16 %v380, %v379
    %v391 = vpack.c.b16 %v382, %v381
    %v392 = vpack.c.b16 %v384, %v383
    %401 = vmatprep.subr.bf16.mxu0 0
    %402 = vmatpush1.bf16.msra.mxu0 %v392
    %403 = vmatprep.subr.bf16.mxu0 0
    %404 = vmatpush1.bf16.msra.mxu0 %v391
    %405 = vmatprep.subr.bf16.mxu0 0
    %406 = vmatpush1.bf16.msra.mxu0 %v390
    %407 = vmatprep.subr.bf16.mxu0 0
    %408 = vmatpush1.bf16.msra.mxu0 %v389
    %409 = vmatprep.subr.bf16.mxu0 0
    %410 = vmatpush1.bf16.msra.mxu0 %v388
    %411 = vmatprep.subr.bf16.mxu0 0
    %412 = vmatpush1.bf16.msra.mxu0 %v387
    %413 = vmatprep.subr.bf16.mxu0 0
    %414 = vmatpush1.bf16.msra.mxu0 %v386
    %415 = vmatprep.subr.bf16.mxu0 0
    %416 = vmatpush1.bf16.msra.mxu0 %v385
    %417 = vmatprep.subr.bf16.mxu0 0
    %418 = vmatpush2.bf16.msra.mxu0 0
    %419 = vmatprep.subr.bf16.mxu0 0
    %420 = vmatpush2.bf16.msra.mxu0 0
    %421 = vmatprep.subr.bf16.mxu0 0
    %422 = vmatpush2.bf16.msra.mxu0 0
    %423 = vmatprep.subr.bf16.mxu0 0
    %424 = vmatpush2.bf16.msra.mxu0 0
    %425 = vmatprep.subr.bf16.mxu0 0
    %426 = vmatpush2.bf16.msra.mxu0 0
    %427 = vmatprep.subr.bf16.mxu0 0
    %428 = vmatpush2.bf16.msra.mxu0 0
    %429 = vmatprep.subr.bf16.mxu0 0
    %430 = vmatpush2.bf16.msra.mxu0 0
    %431 = vmatprep.subr.bf16.mxu0 0
    %432 = vmatpush2.bf16.msra.mxu0 0
    %433 = vmatprep.mubr.bf16.mxu0 0
    %434 = vmatmul.mubr.bf16.gmra.mxu0 %v322
    %v435 = vpop.f32.mrf.mxu0
    %v436 = vadd.f32 %v351, %v435
    %v437 = vpop.f32.mrf.mxu0
    %v438 = vpop.f32.mrf.mxu0
    %v439 = vadd.f32 %v351, %v438
    %v440 = vpop.f32.mrf.mxu0
    %441 = vmatprep.mubr.bf16.mxu0 0
    %442 = vmatmul.mubr.bf16.gmra.mxu0 %v323
    %v443 = vpop.f32.mrf.mxu0
    %v444 = vadd.f32 %v351, %v443
    %v445 = vpop.f32.mrf.mxu0
    %v446 = vpop.f32.mrf.mxu0
    %v447 = vadd.f32 %v351, %v446
    %v448 = vpop.f32.mrf.mxu0
    %449 = vmatprep.mubr.bf16.mxu0 0
    %450 = vmatmul.mubr.bf16.gmra.mxu0 %v324
    %v451 = vpop.f32.mrf.mxu0
    %v452 = vadd.f32 %v351, %v451
    %v453 = vpop.f32.mrf.mxu0
    %v454 = vpop.f32.mrf.mxu0
    %v455 = vadd.f32 %v351, %v454
    %v456 = vpop.f32.mrf.mxu0
    %457 = vmatprep.mubr.bf16.mxu0 0
    %458 = vmatmul.mubr.bf16.gmra.mxu0 %v325
    %v459 = vpop.f32.mrf.mxu0
    %v460 = vadd.f32 %v351, %v459
    %v461 = vpop.f32.mrf.mxu0
    %v462 = vpop.f32.mrf.mxu0
    %v463 = vadd.f32 %v351, %v462
    %v464 = vpop.f32.mrf.mxu0
    %465 = vmatprep.mubr.bf16.mxu0 0
    %466 = vmatmul.mubr.bf16.gmra.mxu0 %v326
    %v467 = vpop.f32.mrf.mxu0
    %v468 = vadd.f32 %v351, %v467
    %v469 = vpop.f32.mrf.mxu0
    %v470 = vpop.f32.mrf.mxu0
    %v471 = vadd.f32 %v351, %v470
    %v472 = vpop.f32.mrf.mxu0
    %473 = vmatprep.mubr.bf16.mxu0 0
    %474 = vmatmul.mubr.bf16.gmra.mxu0 %v327
    %v475 = vpop.f32.mrf.mxu0
    %v476 = vadd.f32 %v351, %v475
    %v477 = vpop.f32.mrf.mxu0
    %v478 = vpop.f32.mrf.mxu0
    %v479 = vadd.f32 %v351, %v478
    %v480 = vpop.f32.mrf.mxu0
    %481 = vmatprep.mubr.bf16.mxu0 0
    %482 = vmatmul.mubr.bf16.gmra.mxu0 %v328
    %v483 = vpop.f32.mrf.mxu0
    %v484 = vadd.f32 %v351, %v483
    %v485 = vpop.f32.mrf.mxu0
    %v486 = vpop.f32.mrf.mxu0
    %v487 = vadd.f32 %v351, %v486
    %v488 = vpop.f32.mrf.mxu0
    %489 = vmatprep.mubr.bf16.mxu0 0
    %490 = vmatmul.mubr.bf16.gmra.mxu0 %v329
    %v491 = vpop.f32.mrf.mxu0
    %v492 = vadd.f32 %v351, %v491
    %v493 = vpop.f32.mrf.mxu0
    %v494 = vpop.f32.mrf.mxu0
    %v495 = vadd.f32 %v351, %v494
    %v496 = vpop.f32.mrf.mxu0
    %497 = vdwg.mxu0
    %v498 = vmax.f32 %v436, 0.0
    %v499 = vmax.f32 %v439, 0.0
    %v500 = vmax.f32 %v444, 0.0
    %v501 = vmax.f32 %v447, 0.0
    %v502 = vmax.f32 %v452, 0.0
    %v503 = vmax.f32 %v455, 0.0
    %v504 = vmax.f32 %v460, 0.0
    %v505 = vmax.f32 %v463, 0.0
    %v506 = vmax.f32 %v468, 0.0
    %v507 = vmax.f32 %v471, 0.0
    %v508 = vmax.f32 %v476, 0.0
    %v509 = vmax.f32 %v479, 0.0
    %v510 = vmax.f32 %v484, 0.0
    %v511 = vmax.f32 %v487, 0.0
    %v512 = vmax.f32 %v492, 0.0
    %v513 = vmax.f32 %v495, 0.0
    %v514 = vpack.c.bf16 %v499, %v498
    %v515 = vpack.c.bf16 %v501, %v500
    %v516 = vpack.c.bf16 %v503, %v502
    %v517 = vpack.c.bf16 %v505, %v504
    %v518 = vpack.c.bf16 %v507, %v506
    %v519 = vpack.c.bf16 %v509, %v508
    %v520 = vpack.c.bf16 %v511, %v510
    %v521 = vpack.c.bf16 %v513, %v512
    %v522 = vld [vmem:[#allocation4] sm:$0xf]
    %v523 = vld [vmem:[#allocation4 + $0x4] sm:$0xf]
    %v524 = vld [vmem:[#allocation4 + $0x8] sm:$0xf]
    %v525 = vld [vmem:[#allocation4 + $0xc] sm:$0xf]
    %v526 = vld [vmem:[#allocation4 + $0x10] sm:$0xf]
    %v527 = vld [vmem:[#allocation4 + $0x14] sm:$0xf]
    %v528 = vld [vmem:[#allocation4 + $0x18] sm:$0xf]
    %v529 = vld [vmem:[#allocation4 + $0x1c] sm:$0xf]
    %v530 = vld [vmem:[#allocation4 + $0x20] sm:$0xf]
    %v531 = vld [vmem:[#allocation4 + $0x24] sm:$0xf]
    %v532 = vld [vmem:[#allocation4 + $0x28] sm:$0xf]
    %v533 = vld [vmem:[#allocation4 + $0x2c] sm:$0xf]
    %v534 = vld [vmem:[#allocation4 + $0x30] sm:$0xf]
    %v535 = vld [vmem:[#allocation4 + $0x34] sm:$0xf]
    %v536 = vld [vmem:[#allocation4 + $0x38] sm:$0xf]
    %v537 = vld [vmem:[#allocation4 + $0x3c] sm:$0xf]
    %v538 = vld [vmem:[%s6] sm:$0x1]
    %v540 = vlaneseq
    %v541 = vshrl.u32 %v540, 7
    %v542 = vsub.s32 0, %v541
    %v543 = vrot.slane %v538, %v542
    %v561 = vunpack.c.l.b16 %v522
    %v562 = vunpack.c.l.b16 %v523
    %v563 = vunpack.c.l.b16 %v524
    %v564 = vunpack.c.l.b16 %v525
    %v565 = vunpack.c.l.b16 %v526
    %v566 = vunpack.c.l.b16 %v527
    %v567 = vunpack.c.l.b16 %v528
    %v568 = vunpack.c.l.b16 %v529
    %v569 = vunpack.c.l.b16 %v530
    %v570 = vunpack.c.l.b16 %v531
    %v571 = vunpack.c.l.b16 %v532
    %v572 = vunpack.c.l.b16 %v533
    %v573 = vunpack.c.l.b16 %v534
    %v574 = vunpack.c.l.b16 %v535
    %v575 = vunpack.c.l.b16 %v536
    %v576 = vunpack.c.l.b16 %v537
    %v577 = vpack.c.b16 %v562, %v561
    %v578 = vpack.c.b16 %v564, %v563
    %v579 = vpack.c.b16 %v566, %v565
    %v580 = vpack.c.b16 %v568, %v567
    %v581 = vpack.c.b16 %v570, %v569
    %v582 = vpack.c.b16 %v572, %v571
    %v583 = vpack.c.b16 %v574, %v573
    %v584 = vpack.c.b16 %v576, %v575
    %593 = vmatprep.subr.bf16.mxu0 0
    %594 = vmatpush1.bf16.msra.mxu0 %v584
    %595 = vmatprep.subr.bf16.mxu0 0
    %596 = vmatpush1.bf16.msra.mxu0 %v583
    %597 = vmatprep.subr.bf16.mxu0 0
    %598 = vmatpush1.bf16.msra.mxu0 %v582
    %599 = vmatprep.subr.bf16.mxu0 0
    %600 = vmatpush1.bf16.msra.mxu0 %v581
    %601 = vmatprep.subr.bf16.mxu0 0
    %602 = vmatpush1.bf16.msra.mxu0 %v580
    %603 = vmatprep.subr.bf16.mxu0 0
    %604 = vmatpush1.bf16.msra.mxu0 %v579
    %605 = vmatprep.subr.bf16.mxu0 0
    %606 = vmatpush1.bf16.msra.mxu0 %v578
    %607 = vmatprep.subr.bf16.mxu0 0
    %608 = vmatpush1.bf16.msra.mxu0 %v577
    %609 = vmatprep.subr.bf16.mxu0 0
    %610 = vmatpush2.bf16.msra.mxu0 0
    %611 = vmatprep.subr.bf16.mxu0 0
    %612 = vmatpush2.bf16.msra.mxu0 0
    %613 = vmatprep.subr.bf16.mxu0 0
    %614 = vmatpush2.bf16.msra.mxu0 0
    %615 = vmatprep.subr.bf16.mxu0 0
    %616 = vmatpush2.bf16.msra.mxu0 0
    %617 = vmatprep.subr.bf16.mxu0 0
    %618 = vmatpush2.bf16.msra.mxu0 0
    %619 = vmatprep.subr.bf16.mxu0 0
    %620 = vmatpush2.bf16.msra.mxu0 0
    %621 = vmatprep.subr.bf16.mxu0 0
    %622 = vmatpush2.bf16.msra.mxu0 0
    %623 = vmatprep.subr.bf16.mxu0 0
    %624 = vmatpush2.bf16.msra.mxu0 0
    %625 = vmatprep.mubr.bf16.mxu0 0
    %626 = vmatmul.mubr.bf16.gmra.mxu0 %v514
    %v627 = vpop.f32.mrf.mxu0
    %v628 = vadd.f32 %v543, %v627
    %v629 = vpop.f32.mrf.mxu0
    %v630 = vpop.f32.mrf.mxu0
    %v631 = vadd.f32 %v543, %v630
    %v632 = vpop.f32.mrf.mxu0
    %633 = vmatprep.mubr.bf16.mxu0 0
    %634 = vmatmul.mubr.bf16.gmra.mxu0 %v515
    %v635 = vpop.f32.mrf.mxu0
    %v636 = vadd.f32 %v543, %v635
    %v637 = vpop.f32.mrf.mxu0
    %v638 = vpop.f32.mrf.mxu0
    %v639 = vadd.f32 %v543, %v638
    %v640 = vpop.f32.mrf.mxu0
    %641 = vmatprep.mubr.bf16.mxu0 0
    %642 = vmatmul.mubr.bf16.gmra.mxu0 %v516
    %v643 = vpop.f32.mrf.mxu0
    %v644 = vadd.f32 %v543, %v643
    %v645 = vpop.f32.mrf.mxu0
    %v646 = vpop.f32.mrf.mxu0
    %v647 = vadd.f32 %v543, %v646
    %v648 = vpop.f32.mrf.mxu0
    %649 = vmatprep.mubr.bf16.mxu0 0
    %650 = vmatmul.mubr.bf16.gmra.mxu0 %v517
    %v651 = vpop.f32.mrf.mxu0
    %v652 = vadd.f32 %v543, %v651
    %v653 = vpop.f32.mrf.mxu0
    %v654 = vpop.f32.mrf.mxu0
    %v655 = vadd.f32 %v543, %v654
    %v656 = vpop.f32.mrf.mxu0
    %657 = vmatprep.mubr.bf16.mxu0 0
    %658 = vmatmul.mubr.bf16.gmra.mxu0 %v518
    %v659 = vpop.f32.mrf.mxu0
    %v660 = vadd.f32 %v543, %v659
    %v661 = vpop.f32.mrf.mxu0
    %v662 = vpop.f32.mrf.mxu0
    %v663 = vadd.f32 %v543, %v662
    %v664 = vpop.f32.mrf.mxu0
    %665 = vmatprep.mubr.bf16.mxu0 0
    %666 = vmatmul.mubr.bf16.gmra.mxu0 %v519
    %v667 = vpop.f32.mrf.mxu0
    %v668 = vadd.f32 %v543, %v667
    %v669 = vpop.f32.mrf.mxu0
    %v670 = vpop.f32.mrf.mxu0
    %v671 = vadd.f32 %v543, %v670
    %v672 = vpop.f32.mrf.mxu0
    %673 = vmatprep.mubr.bf16.mxu0 0
    %674 = vmatmul.mubr.bf16.gmra.mxu0 %v520
    %v675 = vpop.f32.mrf.mxu0
    %v676 = vadd.f32 %v543, %v675
    %v677 = vpop.f32.mrf.mxu0
    %v678 = vpop.f32.mrf.mxu0
    %v679 = vadd.f32 %v543, %v678
    %v680 = vpop.f32.mrf.mxu0
    %681 = vmatprep.mubr.bf16.mxu0 0
    %682 = vmatmul.mubr.bf16.gmra.mxu0 %v521
    %v683 = vpop.f32.mrf.mxu0
    %v684 = vadd.f32 %v543, %v683
    %v685 = vpop.f32.mrf.mxu0
    %v686 = vpop.f32.mrf.mxu0
    %v687 = vadd.f32 %v543, %v686
    %v688 = vpop.f32.mrf.mxu0
    %689 = vdwg.mxu0
    %v690 = vmax.f32 %v628, 0.0
    %v691 = vmax.f32 %v631, 0.0
    %v692 = vmax.f32 %v636, 0.0
    %v693 = vmax.f32 %v639, 0.0
    %v694 = vmax.f32 %v644, 0.0
    %v695 = vmax.f32 %v647, 0.0
    %v696 = vmax.f32 %v652, 0.0
    %v697 = vmax.f32 %v655, 0.0
    %v698 = vmax.f32 %v660, 0.0
    %v699 = vmax.f32 %v663, 0.0
    %v700 = vmax.f32 %v668, 0.0
    %v701 = vmax.f32 %v671, 0.0
    %v702 = vmax.f32 %v676, 0.0
    %v703 = vmax.f32 %v679, 0.0
    %v704 = vmax.f32 %v684, 0.0
    %v705 = vmax.f32 %v687, 0.0
    %v706 = vpack.c.bf16 %v691, %v690
    %v707 = vpack.c.bf16 %v693, %v692
    %v708 = vpack.c.bf16 %v695, %v694
    %v709 = vpack.c.bf16 %v697, %v696
    %v710 = vpack.c.bf16 %v699, %v698
    %v711 = vpack.c.bf16 %v701, %v700
    %v712 = vpack.c.bf16 %v703, %v702
    %v713 = vpack.c.bf16 %v705, %v704
    %v714 = vld [vmem:[#allocation6] sm:$0xf]
    %v715 = vld [vmem:[#allocation6 + $0x4] sm:$0xf]
    %v716 = vld [vmem:[#allocation6 + $0x8] sm:$0xf]
    %v717 = vld [vmem:[#allocation6 + $0xc] sm:$0xf]
    %v718 = vld [vmem:[#allocation6 + $0x10] sm:$0xf]
    %v719 = vld [vmem:[#allocation6 + $0x14] sm:$0xf]
    %v720 = vld [vmem:[#allocation6 + $0x18] sm:$0xf]
    %v721 = vld [vmem:[#allocation6 + $0x1c] sm:$0xf]
    %v722 = vld [vmem:[#allocation6 + $0x20] sm:$0xf]
    %v723 = vld [vmem:[#allocation6 + $0x24] sm:$0xf]
    %v724 = vld [vmem:[#allocation6 + $0x28] sm:$0xf]
    %v725 = vld [vmem:[#allocation6 + $0x2c] sm:$0xf]
    %v726 = vld [vmem:[#allocation6 + $0x30] sm:$0xf]
    %v727 = vld [vmem:[#allocation6 + $0x34] sm:$0xf]
    %v728 = vld [vmem:[#allocation6 + $0x38] sm:$0xf]
    %v729 = vld [vmem:[#allocation6 + $0x3c] sm:$0xf]
    %v730 = vld [vmem:[%s8] sm:$0x1]
    %v732 = vlaneseq
    %v733 = vshrl.u32 %v732, 7
    %v734 = vsub.s32 0, %v733
    %v735 = vrot.slane %v730, %v734
    %v753 = vunpack.c.l.b16 %v714
    %v754 = vunpack.c.l.b16 %v715
    %v755 = vunpack.c.l.b16 %v716
    %v756 = vunpack.c.l.b16 %v717
    %v757 = vunpack.c.l.b16 %v718
    %v758 = vunpack.c.l.b16 %v719
    %v759 = vunpack.c.l.b16 %v720
    %v760 = vunpack.c.l.b16 %v721
    %v761 = vunpack.c.l.b16 %v722
    %v762 = vunpack.c.l.b16 %v723
    %v763 = vunpack.c.l.b16 %v724
    %v764 = vunpack.c.l.b16 %v725
    %v765 = vunpack.c.l.b16 %v726
    %v766 = vunpack.c.l.b16 %v727
    %v767 = vunpack.c.l.b16 %v728
    %v768 = vunpack.c.l.b16 %v729
    %v769 = vpack.c.b16 %v754, %v753
    %v770 = vpack.c.b16 %v756, %v755
    %v771 = vpack.c.b16 %v758, %v757
    %v772 = vpack.c.b16 %v760, %v759
    %v773 = vpack.c.b16 %v762, %v761
    %v774 = vpack.c.b16 %v764, %v763
    %v775 = vpack.c.b16 %v766, %v765
    %v776 = vpack.c.b16 %v768, %v767
    %785 = vmatprep.subr.bf16.mxu0 0
    %786 = vmatpush1.bf16.msra.mxu0 %v776
    %787 = vmatprep.subr.bf16.mxu0 0
    %788 = vmatpush1.bf16.msra.mxu0 %v775
    %789 = vmatprep.subr.bf16.mxu0 0
    %790 = vmatpush1.bf16.msra.mxu0 %v774
    %791 = vmatprep.subr.bf16.mxu0 0
    %792 = vmatpush1.bf16.msra.mxu0 %v773
    %793 = vmatprep.subr.bf16.mxu0 0
    %794 = vmatpush1.bf16.msra.mxu0 %v772
    %795 = vmatprep.subr.bf16.mxu0 0
    %796 = vmatpush1.bf16.msra.mxu0 %v771
    %797 = vmatprep.subr.bf16.mxu0 0
    %798 = vmatpush1.bf16.msra.mxu0 %v770
    %799 = vmatprep.subr.bf16.mxu0 0
    %800 = vmatpush1.bf16.msra.mxu0 %v769
    %801 = vmatprep.subr.bf16.mxu0 0
    %802 = vmatpush2.bf16.msra.mxu0 0
    %803 = vmatprep.subr.bf16.mxu0 0
    %804 = vmatpush2.bf16.msra.mxu0 0
    %805 = vmatprep.subr.bf16.mxu0 0
    %806 = vmatpush2.bf16.msra.mxu0 0
    %807 = vmatprep.subr.bf16.mxu0 0
    %808 = vmatpush2.bf16.msra.mxu0 0
    %809 = vmatprep.subr.bf16.mxu0 0
    %810 = vmatpush2.bf16.msra.mxu0 0
    %811 = vmatprep.subr.bf16.mxu0 0
    %812 = vmatpush2.bf16.msra.mxu0 0
    %813 = vmatprep.subr.bf16.mxu0 0
    %814 = vmatpush2.bf16.msra.mxu0 0
    %815 = vmatprep.subr.bf16.mxu0 0
    %816 = vmatpush2.bf16.msra.mxu0 0
    %817 = vmatprep.mubr.bf16.mxu0 0
    %818 = vmatmul.mubr.bf16.gmra.mxu0 %v706
    %v819 = vpop.f32.mrf.mxu0
    %v820 = vadd.f32 %v735, %v819
    %v821 = vpop.f32.mrf.mxu0
    %v822 = vpop.f32.mrf.mxu0
    %v823 = vadd.f32 %v735, %v822
    %v824 = vpop.f32.mrf.mxu0
    %825 = vmatprep.mubr.bf16.mxu0 0
    %826 = vmatmul.mubr.bf16.gmra.mxu0 %v707
    %v827 = vpop.f32.mrf.mxu0
    %v828 = vadd.f32 %v735, %v827
    %v829 = vpop.f32.mrf.mxu0
    %v830 = vpop.f32.mrf.mxu0
    %v831 = vadd.f32 %v735, %v830
    %v832 = vpop.f32.mrf.mxu0
    %833 = vmatprep.mubr.bf16.mxu0 0
    %834 = vmatmul.mubr.bf16.gmra.mxu0 %v708
    %v835 = vpop.f32.mrf.mxu0
    %v836 = vadd.f32 %v735, %v835
    %v837 = vpop.f32.mrf.mxu0
    %v838 = vpop.f32.mrf.mxu0
    %v839 = vadd.f32 %v735, %v838
    %v840 = vpop.f32.mrf.mxu0
    %841 = vmatprep.mubr.bf16.mxu0 0
    %842 = vmatmul.mubr.bf16.gmra.mxu0 %v709
    %v843 = vpop.f32.mrf.mxu0
    %v844 = vadd.f32 %v735, %v843
    %v845 = vpop.f32.mrf.mxu0
    %v846 = vpop.f32.mrf.mxu0
    %v847 = vadd.f32 %v735, %v846
    %v848 = vpop.f32.mrf.mxu0
    %849 = vmatprep.mubr.bf16.mxu0 0
    %850 = vmatmul.mubr.bf16.gmra.mxu0 %v710
    %v851 = vpop.f32.mrf.mxu0
    %v852 = vadd.f32 %v735, %v851
    %v853 = vpop.f32.mrf.mxu0
    %v854 = vpop.f32.mrf.mxu0
    %v855 = vadd.f32 %v735, %v854
    %v856 = vpop.f32.mrf.mxu0
    %857 = vmatprep.mubr.bf16.mxu0 0
    %858 = vmatmul.mubr.bf16.gmra.mxu0 %v711
    %v859 = vpop.f32.mrf.mxu0
    %v860 = vadd.f32 %v735, %v859
    %v861 = vpop.f32.mrf.mxu0
    %v862 = vpop.f32.mrf.mxu0
    %v863 = vadd.f32 %v735, %v862
    %v864 = vpop.f32.mrf.mxu0
    %865 = vmatprep.mubr.bf16.mxu0 0
    %866 = vmatmul.mubr.bf16.gmra.mxu0 %v712
    %v867 = vpop.f32.mrf.mxu0
    %v868 = vadd.f32 %v735, %v867
    %v869 = vpop.f32.mrf.mxu0
    %v870 = vpop.f32.mrf.mxu0
    %v871 = vadd.f32 %v735, %v870
    %v872 = vpop.f32.mrf.mxu0
    %873 = vmatprep.mubr.bf16.mxu0 0
    %874 = vmatmul.mubr.bf16.gmra.mxu0 %v713
    %v875 = vpop.f32.mrf.mxu0
    %v876 = vadd.f32 %v735, %v875
    %v877 = vpop.f32.mrf.mxu0
    %v878 = vpop.f32.mrf.mxu0
    %v879 = vadd.f32 %v735, %v878
    %v880 = vpop.f32.mrf.mxu0
    %881 = vdwg.mxu0
    %882 = vst [vmem:[%s9] sm:$0xff] %v820
    %883 = vst [vmem:[%s9 + $0x8] sm:$0xff] %v823
    %884 = vst [vmem:[%s9 + $0x10] sm:$0xff] %v828
    %885 = vst [vmem:[%s9 + $0x18] sm:$0xff] %v831
    %886 = vst [vmem:[%s9 + $0x20] sm:$0xff] %v836
    %887 = vst [vmem:[%s9 + $0x28] sm:$0xff] %v839
    %888 = vst [vmem:[%s9 + $0x30] sm:$0xff] %v844
    %889 = vst [vmem:[%s9 + $0x38] sm:$0xff] %v847
    %890 = vst [vmem:[%s9 + $0x40] sm:$0xff] %v852
    %891 = vst [vmem:[%s9 + $0x48] sm:$0xff] %v855
    %892 = vst [vmem:[%s9 + $0x50] sm:$0xff] %v860
    %893 = vst [vmem:[%s9 + $0x58] sm:$0xff] %v863
    %894 = vst [vmem:[%s9 + $0x60] sm:$0xff] %v868
    %895 = vst [vmem:[%s9 + $0x68] sm:$0xff] %v871
    %896 = vst [vmem:[%s9 + $0x70] sm:$0xff] %v876
    %897 = vst [vmem:[%s9 + $0x78] sm:$0xff] %v879
    // Predicated region
    $region50: #{_forward.1} parent=1 // pred_check
      _
    $region51: #{_forward.1} parent=1 // pred_check_branch
      %899 = sbr.rel (0) target = $region53
    $region52: #{_forward.1} parent=1 // pred_region
      _
    $region53: #{_forward.1} parent=1 // pred_fallthru
      _
    // Predicated region
    $region54: #{_forward.1} parent=1 // pred_check
      _
    $region55: #{_forward.1} parent=1 // pred_check_branch
      %901 = sbr.rel (0) target = $region57
    $region56: #{_forward.1} parent=1 // pred_region
      _
    $region57: #{_forward.1} parent=1 // pred_fallthru
      _
    %902 = vsyncpa [#allocation3], 1
    %903 = vsyncpa [#allocation5], 1

</llo_original>
